<compile_context>
chip_gen: v5e
topology: v5e:2x2
jax: 0.10.0
libtpu: 0.0.40
codegen_flags: <defaults>
</compile_context>

<pallas_src>
import jax
import jax.numpy as jnp
from jax import lax
from jax.experimental import pallas as pl
from jax.experimental.pallas import tpu as pltpu

_BN_EPS = 1e-5
_LANE = 128


def _round_up(n, m):
    return ((n + m - 1) // m) * m


def _pad2(a, rows, cols):
    return jnp.pad(a, ((0, rows - a.shape[0]), (0, cols - a.shape[1])))


def _make_mlp_kernel(num_layers):
    """Fused MLP kernel for a fixed (static) number of layers.

    Ref layout: (x_ref, *param_refs, o_ref) where param_refs are, per hidden
    layer i < num_layers-1: (W[i] bf16, gamma[i] f32, beta[i] f32) — the
    hidden-layer linear bias is intentionally absent (cancelled by BN) —
    and for the final layer: (W bf16, b f32).
    """

    def kernel(*refs):
        x_ref = refs[0]
        o_ref = refs[-1]
        p = refs[1:-1]

        x = x_ref[...]                                  # bf16 [M, Dp], lane-dense
        m_rows = x_ref.shape[0]
        inv_m = 1.0 / float(m_rows)                     # static

        idx = 0
        for _ in range(num_layers - 1):
            w = p[idx][...]                             # bf16 [Dp, Hp]
            gamma = p[idx + 1][...]                     # f32  [1, Hp]
            beta = p[idx + 2][...]                      # f32  [1, Hp]
            idx += 3

            # Linear (no bias: BN mean-subtraction cancels it exactly).
            h = jnp.dot(x, w, preferred_element_type=jnp.float32)   # f32 [M, Hp]

            # One-pass train-mode BN batch statistics (biased variance) over
            # the M = B*N tokens.  TODO(synk): at large M do these reductions
            # as ones[1,M] @ h / ones[1,M] @ (h*h) on the MXU.
            s1 = jnp.sum(h, axis=0, keepdims=True)                   # [1, Hp]
            s2 = jnp.sum(h * h, axis=0, keepdims=True)               # [1, Hp]
            mean = s1 * inv_m
            var = jnp.maximum(s2 * inv_m - mean * mean, 0.0)

            # Folded BN: one scale + one shift, rsqrt on the EUP slot.
            scale = gamma * lax.rsqrt(var + _BN_EPS)                 # [1, Hp]
            shift = beta - mean * scale                              # [1, Hp]

            # Normalize + ReLU, cast to bf16 for the next MXU push.
            x = jnp.maximum(h * scale + shift, 0.0).astype(jnp.bfloat16)

        # Final layer: plain linear with bias (no BN/ReLU).
        w = p[idx][...]                                  # bf16 [Hp, Ep]
        b = p[idx + 1][...]                              # f32  [1, Ep]
        out = jnp.dot(x, w, preferred_element_type=jnp.float32) + b
        o_ref[...] = out.astype(o_ref.dtype)

    return kernel


def prepare_params(params, num_layers):
    """One-time param prep: pad feature dims to lane (128) multiples, cast
    weights to bf16 at rest, drop hidden-layer biases (cancelled by BN)."""
    ws, bs = params["w"], params["b"]
    gammas, betas = params["gamma"], params["beta"]

    flat = []
    for i in range(num_layers - 1):
        n_in, n_out = ws[i].shape
        ip, op = _round_up(n_in, _LANE), _round_up(n_out, _LANE)
        flat.append(_pad2(ws[i], ip, op).astype(jnp.bfloat16))   # W  (bf16)
        flat.append(_pad2(gammas[i], 1, op))                     # gamma (f32)
        flat.append(_pad2(betas[i], 1, op))                      # beta  (f32)
        # hidden bias bs[i] intentionally dropped.
    n_in, n_out = ws[-1].shape
    ip, op = _round_up(n_in, _LANE), _round_up(n_out, _LANE)
    flat.append(_pad2(ws[-1], ip, op).astype(jnp.bfloat16))      # W_last (bf16)
    flat.append(_pad2(bs[-1], 1, op))                            # b_last (f32)
    return flat


def mlp_forward(x, flat_params, num_layers, output_dim):
    """Fused forward for x of shape [B, N, input_dim] using prepared params."""
    B, N, D = x.shape
    M = B * N
    d_pad = flat_params[0].shape[0]
    out_pad = flat_params[-1].shape[1]

    # Lane-pad the input features and enter the kernel in bf16.
    x2d = x.reshape(M, D)
    if d_pad != D:
        x2d = jnp.pad(x2d, ((0, 0), (0, d_pad - D)))
    x2d = x2d.astype(jnp.bfloat16)

    kernel = _make_mlp_kernel(num_layers)

    in_specs = [pl.BlockSpec(memory_space=pltpu.MemorySpace.VMEM)
                for _ in range(1 + len(flat_params))]
    out_specs = pl.BlockSpec(memory_space=pltpu.MemorySpace.VMEM)

    out2d = pl.pallas_call(
        kernel,
        out_shape=jax.ShapeDtypeStruct((M, out_pad), jnp.float32),
        in_specs=in_specs,
        out_specs=out_specs,
        compiler_params=pltpu.CompilerParams(vmem_limit_bytes=48 * 1024 * 1024),
    )(x2d, *flat_params)

    if out_pad != output_dim:
        out2d = out2d[:, :output_dim]
    return out2d.reshape(B, N, output_dim)


def mlp_reference(x, params, num_layers):
    """Pure-JAX fp32 reference mirroring the PyTorch forward (train-mode BN,
    hidden biases INCLUDED — verifies the kernel's bias-drop equivalence)."""
    B, N, D = x.shape
    h = x.reshape(B * N, D)
    for i in range(num_layers - 1):
        h = h @ params["w"][i] + params["b"][i]
        mean = jnp.mean(h, axis=0, keepdims=True)
        var = jnp.mean((h - mean) ** 2, axis=0, keepdims=True)
        h = (h - mean) / jnp.sqrt(var + _BN_EPS) * params["gamma"][i] + params["beta"][i]
        h = jnp.maximum(h, 0.0)
    h = h @ params["w"][-1] + params["b"][-1]
    return h.reshape(B, N, -1)


def make_params(key, input_dim, hidden_dim, output_dim, num_layers):
    """Deterministic synthetic parameters (shapes as in MLP.__init__)."""
    hs = [hidden_dim] * (num_layers - 1)
    dims_in = [input_dim] + hs
    dims_out = hs + [output_dim]

    ws, bs, gammas, betas = [], [], [], []
    keys = jax.random.split(key, 4 * num_layers)
    for i, (n_in, n_out) in enumerate(zip(dims_in, dims_out)):
        k0, k1, k2, k3 = keys[4 * i: 4 * i + 4]
        bound = float(n_in) ** -0.5
        ws.append(jax.random.uniform(k0, (n_in, n_out), jnp.float32, -bound, bound))
        bs.append(jax.random.uniform(k1, (1, n_out), jnp.float32, -bound, bound))
        if i < num_layers - 1:
            gammas.append(1.0 + 0.1 * jax.random.normal(k2, (1, n_out), jnp.float32))
            betas.append(0.1 * jax.random.normal(k3, (1, n_out), jnp.float32))
    return {"w": ws, "b": bs, "gamma": gammas, "beta": betas}


if __name__ == "__main__":
    # Small shapes consistent with the module: B=2 images, N=8 tokens,
    # input_dim=32, hidden_dim=32, output_dim=128, num_layers=2.
    B, N = 2, 8
    input_dim, hidden_dim, output_dim, num_layers = 32, 32, 128, 2

    key = jax.random.PRNGKey(0)
    kx, kp = jax.random.split(key)

    x = jax.random.normal(kx, (B, N, input_dim), jnp.float32)
    params = make_params(kp, input_dim, hidden_dim, output_dim, num_layers)

    # One-time prep: lane-pad + bf16-cast params (kept bf16 at rest).
    flat_params = prepare_params(params, num_layers)

    out = mlp_forward(x, flat_params, num_layers, output_dim)
    out = jax.block_until_ready(out)

    ref = mlp_reference(x, params, num_layers)

    assert out.shape == (B, N, output_dim), out.shape
    assert out.dtype == jnp.float32, out.dtype
    assert bool(jnp.all(jnp.isfinite(out)))
    max_err = float(jnp.max(jnp.abs(out - ref)))
    assert max_err < 5e-2, f"max abs error vs fp32 reference: {max_err}"
    print("KERNEL_OK")
</pallas_src>

<mosaic_0001>
module attributes {stable_mosaic.version = 11 : i64} {
  func.func @kernel(%arg0: memref<16x128xbf16, #tpu.memory_space<vmem>>, %arg1: memref<128x128xbf16, #tpu.memory_space<vmem>>, %arg2: memref<1x128xf32, #tpu.memory_space<vmem>>, %arg3: memref<1x128xf32, #tpu.memory_space<vmem>>, %arg4: memref<128x128xbf16, #tpu.memory_space<vmem>>, %arg5: memref<1x128xf32, #tpu.memory_space<vmem>>, %arg6: memref<16x128xf32, #tpu.memory_space<vmem>>) attributes {dimension_semantics = [], scalar_prefetch = 0 : i64, scratch_operands = 0 : i64, tpu.core_type = #tpu.core_type<tc>} {
    %c0 = arith.constant 0 : index
    %c0_0 = arith.constant 0 : index
    %0 = vector.load %arg0[%c0, %c0_0] : memref<16x128xbf16, #tpu.memory_space<vmem>>, vector<16x128xbf16>
    %c0_1 = arith.constant 0 : index
    %c0_2 = arith.constant 0 : index
    %1 = vector.load %arg1[%c0_1, %c0_2] : memref<128x128xbf16, #tpu.memory_space<vmem>>, vector<128x128xbf16>
    %c0_3 = arith.constant 0 : index
    %c0_4 = arith.constant 0 : index
    %2 = vector.load %arg2[%c0_3, %c0_4] : memref<1x128xf32, #tpu.memory_space<vmem>>, vector<1x128xf32>
    %c0_5 = arith.constant 0 : index
    %c0_6 = arith.constant 0 : index
    %3 = vector.load %arg3[%c0_5, %c0_6] : memref<1x128xf32, #tpu.memory_space<vmem>>, vector<1x128xf32>
    %cst = arith.constant dense<0.000000e+00> : vector<16x128xf32>
    %4 = tpu.matmul %0, %1, %cst {dimension_numbers = #tpu.dot_dimension_numbers<[1], [0], [0], [1], [0, 0, 1, 1], [], []>} : vector<16x128xbf16>, vector<128x128xbf16>, vector<16x128xf32> -> vector<16x128xf32>
    %cst_7 = arith.constant dense<0.000000e+00> : vector<128xf32>
    %5 = vector.multi_reduction <add>, %4, %cst_7 [0] : vector<16x128xf32> to vector<128xf32>
    %6 = vector.shape_cast %5 : vector<128xf32> to vector<1x128xf32>
    %7 = arith.mulf %4, %4 : vector<16x128xf32>
    %cst_8 = arith.constant dense<0.000000e+00> : vector<128xf32>
    %8 = vector.multi_reduction <add>, %7, %cst_8 [0] : vector<16x128xf32> to vector<128xf32>
    %9 = vector.shape_cast %8 : vector<128xf32> to vector<1x128xf32>
    %cst_9 = arith.constant 6.250000e-02 : f32
    %10 = vector.broadcast %cst_9 : f32 to vector<1x128xf32>
    %11 = arith.mulf %6, %10 : vector<1x128xf32>
    %cst_10 = arith.constant 6.250000e-02 : f32
    %12 = vector.broadcast %cst_10 : f32 to vector<1x128xf32>
    %13 = arith.mulf %9, %12 : vector<1x128xf32>
    %14 = arith.mulf %11, %11 : vector<1x128xf32>
    %15 = arith.subf %13, %14 : vector<1x128xf32>
    %cst_11 = arith.constant 0.000000e+00 : f32
    %16 = vector.broadcast %cst_11 : f32 to vector<1x128xf32>
    %17 = arith.maximumf %15, %16 : vector<1x128xf32>
    %cst_12 = arith.constant 9.99999974E-6 : f32
    %18 = vector.broadcast %cst_12 : f32 to vector<1x128xf32>
    %19 = arith.addf %17, %18 : vector<1x128xf32>
    %20 = math.rsqrt %19 : vector<1x128xf32>
    %21 = arith.mulf %2, %20 : vector<1x128xf32>
    %22 = arith.mulf %11, %21 : vector<1x128xf32>
    %23 = arith.subf %3, %22 : vector<1x128xf32>
    %24 = vector.broadcast %21 : vector<1x128xf32> to vector<16x128xf32>
    %25 = arith.mulf %4, %24 : vector<16x128xf32>
    %26 = vector.broadcast %23 : vector<1x128xf32> to vector<16x128xf32>
    %27 = arith.addf %25, %26 : vector<16x128xf32>
    %cst_13 = arith.constant 0.000000e+00 : f32
    %28 = vector.broadcast %cst_13 : f32 to vector<16x128xf32>
    %29 = arith.maximumf %27, %28 : vector<16x128xf32>
    %30 = arith.truncf %29 : vector<16x128xf32> to vector<16x128xbf16>
    %c0_14 = arith.constant 0 : index
    %c0_15 = arith.constant 0 : index
    %31 = vector.load %arg4[%c0_14, %c0_15] : memref<128x128xbf16, #tpu.memory_space<vmem>>, vector<128x128xbf16>
    %c0_16 = arith.constant 0 : index
    %c0_17 = arith.constant 0 : index
    %32 = vector.load %arg5[%c0_16, %c0_17] : memref<1x128xf32, #tpu.memory_space<vmem>>, vector<1x128xf32>
    %cst_18 = arith.constant dense<0.000000e+00> : vector<16x128xf32>
    %33 = tpu.matmul %30, %31, %cst_18 {dimension_numbers = #tpu.dot_dimension_numbers<[1], [0], [0], [1], [0, 0, 1, 1], [], []>} : vector<16x128xbf16>, vector<128x128xbf16>, vector<16x128xf32> -> vector<16x128xf32>
    %34 = vector.broadcast %32 : vector<1x128xf32> to vector<16x128xf32>
    %35 = arith.addf %33, %34 : vector<16x128xf32>
    %c0_19 = arith.constant 0 : index
    %c0_20 = arith.constant 0 : index
    %36 = vector.load %arg6[%c0_19, %c0_20] : memref<16x128xf32, #tpu.memory_space<vmem>>, vector<16x128xf32>
    tpu.vector_store %arg6[%c0_19, %c0_20], %35 {strides = array<i32>} : memref<16x128xf32, #tpu.memory_space<vmem>>, vector<16x128xf32>,
    return
  }
}

</mosaic_0001>

<llo_original>
// kernel: tpu_custom_call.1
$region0: #{tpu_custom_call.1}
  #allocation0 [shape = 'u32[]', space=smem, size = 0x4, offset = 0x4, fixed_abs, tag = 'smem constant byte address 0x4 - core index']
  #allocation1 [shape = 'u32[72,128]{1,0:T(1,128)}', space=vmem, size = 0x9000, scoped, tag = 'internal scratch']
  %s0 = inlined_call_operand.hbm [shape: bf16[16,128], index: 0, kind: input, shape index: {}]
  %s1 = inlined_call_operand.hbm [shape: bf16[128,128], index: 1, kind: input, shape index: {}]
  %s2 = inlined_call_operand.vmem [shape: f32[1,128], index: 2, kind: input, shape index: {}]
  %s3 = inlined_call_operand.vmem [shape: f32[1,128], index: 3, kind: input, shape index: {}]
  %s4 = inlined_call_operand.hbm [shape: bf16[128,128], index: 4, kind: input, shape index: {}]
  %s5 = inlined_call_operand.vmem [shape: f32[1,128], index: 5, kind: input, shape index: {}]
  %s6 = inlined_call_operand.hbm [shape: f32[16,128], index: 6, kind: output, shape index: {}]
  %s7 = sld [smem:[#allocation0]]
  $region46: #{tpu_custom_call.1} parent=0
    _
  %s9 = ssub.s32 1, %s7
  %s10 = scalar_select 0, %s9, %s7
  $region1: #{tpu_custom_call.1} parent=0
    #allocation2 [shape = 'u8[4096]{0}', space=vmem, size = 0x1000, scoped, tag = 'input window, operand 0, single buffered']
    #allocation3 [shape = 's32[1]{0}', space=sflag, size = 0x4, scoped, tag = 'scoped memory for tpu_custom_call.1']
    #allocation4 [shape = 's32[1]{0}', space=sflag, size = 0x4, scoped, tag = 'scoped memory for tpu_custom_call.1']
    #allocation5 [shape = 'u8[32768]{0}', space=vmem, size = 0x8000, scoped, tag = 'input window, operand 1, single buffered']
    #allocation6 [shape = 's32[1]{0}', space=sflag, size = 0x4, scoped, tag = 'scoped memory for tpu_custom_call.1']
    #allocation7 [shape = 'u8[32768]{0}', space=vmem, size = 0x8000, scoped, tag = 'input window, operand 4, single buffered']
    #allocation8 [shape = 'u8[8192]{0}', space=vmem, size = 0x2000, scoped, tag = 'output window, operand 0, single buffered']
    %11 = vsyncpa [#allocation3], 0
    %12 = vsyncpa [#allocation6], 0
    %13 = vsyncpa [#allocation4], 0
    // Predicated region
    $region2: #{tpu_custom_call.1} parent=1 // pred_check
      _
    $region3: #{tpu_custom_call.1} parent=1 // pred_check_branch
      %15 = sbr.rel (0) target = $region5
    $region4: #{tpu_custom_call.1} parent=1 // pred_region
      %17 = vsyncadd [#allocation3], 0
      %s18 = sshll.u32 %s0, 4
      %s19 = int_to_ptr.hbm [resolvable:$true] %s18
      %s20 = sshll.u32 [#allocation2], 4
      %s21 = int_to_ptr.vmem [resolvable:$true] %s20
      %26 = dma.hbm_to_vmem [thread:$0]  %s19, 128, %s21, [#allocation3], 64, 64, 4
    $region5: #{tpu_custom_call.1} parent=1 // pred_fallthru
      _
    // Predicated region
    $region6: #{tpu_custom_call.1} parent=1 // pred_check
      _
    $region7: #{tpu_custom_call.1} parent=1 // pred_check_branch
      %28 = sbr.rel (0) target = $region9
    $region8: #{tpu_custom_call.1} parent=1 // pred_region
      %30 = vsyncadd [#allocation6], 0
      %s31 = sshll.u32 %s1, 4
      %s32 = int_to_ptr.hbm [resolvable:$true] %s31
      %s33 = sshll.u32 [#allocation5], 4
      %s34 = int_to_ptr.vmem [resolvable:$true] %s33
      %39 = dma.hbm_to_vmem [thread:$0]  %s32, 1024, %s34, [#allocation6], 64, 64, 4
    $region9: #{tpu_custom_call.1} parent=1 // pred_fallthru
      _
    // Predicated region
    $region10: #{tpu_custom_call.1} parent=1 // pred_check
      _
    $region11: #{tpu_custom_call.1} parent=1 // pred_check_branch
      %41 = sbr.rel (0) target = $region13
    $region12: #{tpu_custom_call.1} parent=1 // pred_region
      _
    $region13: #{tpu_custom_call.1} parent=1 // pred_fallthru
      _
    // Predicated region
    $region14: #{tpu_custom_call.1} parent=1 // pred_check
      _
    $region15: #{tpu_custom_call.1} parent=1 // pred_check_branch
      %43 = sbr.rel (0) target = $region17
    $region16: #{tpu_custom_call.1} parent=1 // pred_region
      _
    $region17: #{tpu_custom_call.1} parent=1 // pred_fallthru
      _
    // Predicated region
    $region18: #{tpu_custom_call.1} parent=1 // pred_check
      _
    $region19: #{tpu_custom_call.1} parent=1 // pred_check_branch
      %45 = sbr.rel (0) target = $region21
    $region20: #{tpu_custom_call.1} parent=1 // pred_region
      %47 = vsyncadd [#allocation6], 0
      %s48 = sshll.u32 %s4, 4
      %s49 = int_to_ptr.hbm [resolvable:$true] %s48
      %s50 = sshll.u32 [#allocation7], 4
      %s51 = int_to_ptr.vmem [resolvable:$true] %s50
      %56 = dma.hbm_to_vmem [thread:$0]  %s49, 1024, %s51, [#allocation6], 64, 64, 4
    $region21: #{tpu_custom_call.1} parent=1 // pred_fallthru
      _
    // Predicated region
    $region22: #{tpu_custom_call.1} parent=1 // pred_check
      _
    $region23: #{tpu_custom_call.1} parent=1 // pred_check_branch
      %58 = sbr.rel (0) target = $region25
    $region24: #{tpu_custom_call.1} parent=1 // pred_region
      _
    $region25: #{tpu_custom_call.1} parent=1 // pred_fallthru
      _
    // Predicated region
    $region26: #{tpu_custom_call.1} parent=1 // pred_check
      _
    $region27: #{tpu_custom_call.1} parent=1 // pred_check_branch
      %60 = sbr.rel (0) target = $region29
    $region28: #{tpu_custom_call.1} parent=1 // pred_region
      %62 = dma.done [#allocation3], 128
    $region29: #{tpu_custom_call.1} parent=1 // pred_fallthru
      _
    // Predicated region
    $region30: #{tpu_custom_call.1} parent=1 // pred_check
      _
    $region31: #{tpu_custom_call.1} parent=1 // pred_check_branch
      %64 = sbr.rel (0) target = $region33
    $region32: #{tpu_custom_call.1} parent=1 // pred_region
      %66 = dma.done [#allocation6], 1024
    $region33: #{tpu_custom_call.1} parent=1 // pred_fallthru
      _
    // Predicated region
    $region34: #{tpu_custom_call.1} parent=1 // pred_check
      _
    $region35: #{tpu_custom_call.1} parent=1 // pred_check_branch
      %68 = sbr.rel (0) target = $region37
    $region36: #{tpu_custom_call.1} parent=1 // pred_region
      %70 = dma.done [#allocation6], 1024
    $region37: #{tpu_custom_call.1} parent=1 // pred_fallthru
      _
    %v71 = vld [vmem:[#allocation2] sm:$0xf]
    %v72 = vld [vmem:[#allocation2 + $0x4] sm:$0xf]
    %v73 = vld [vmem:[#allocation5] sm:$0xf]
    %v74 = vld [vmem:[#allocation5 + $0x4] sm:$0xf]
    %v75 = vld [vmem:[#allocation5 + $0x8] sm:$0xf]
    %v76 = vld [vmem:[#allocation5 + $0xc] sm:$0xf]
    %v77 = vld [vmem:[#allocation5 + $0x10] sm:$0xf]
    %v78 = vld [vmem:[#allocation5 + $0x14] sm:$0xf]
    %v79 = vld [vmem:[#allocation5 + $0x18] sm:$0xf]
    %v80 = vld [vmem:[#allocation5 + $0x1c] sm:$0xf]
    %v81 = vld [vmem:[#allocation5 + $0x20] sm:$0xf]
    %v82 = vld [vmem:[#allocation5 + $0x24] sm:$0xf]
    %v83 = vld [vmem:[#allocation5 + $0x28] sm:$0xf]
    %v84 = vld [vmem:[#allocation5 + $0x2c] sm:$0xf]
    %v85 = vld [vmem:[#allocation5 + $0x30] sm:$0xf]
    %v86 = vld [vmem:[#allocation5 + $0x34] sm:$0xf]
    %v87 = vld [vmem:[#allocation5 + $0x38] sm:$0xf]
    %v88 = vld [vmem:[#allocation5 + $0x3c] sm:$0xf]
    %v89 = vld [vmem:[%s2] sm:$0x1]
    %v90 = vld [vmem:[%s3] sm:$0x1]
    %v93 = vunpack.c.l.b16 %v71
    %v94 = vunpack.c.l.b16 %v72
    %v95 = vpack.c.b16 %v94, %v93
    %v113 = vunpack.c.l.b16 %v73
    %v114 = vunpack.c.l.b16 %v74
    %v115 = vunpack.c.l.b16 %v75
    %v116 = vunpack.c.l.b16 %v76
    %v117 = vunpack.c.l.b16 %v77
    %v118 = vunpack.c.l.b16 %v78
    %v119 = vunpack.c.l.b16 %v79
    %v120 = vunpack.c.l.b16 %v80
    %v121 = vunpack.c.l.b16 %v81
    %v122 = vunpack.c.l.b16 %v82
    %v123 = vunpack.c.l.b16 %v83
    %v124 = vunpack.c.l.b16 %v84
    %v125 = vunpack.c.l.b16 %v85
    %v126 = vunpack.c.l.b16 %v86
    %v127 = vunpack.c.l.b16 %v87
    %v128 = vunpack.c.l.b16 %v88
    %v129 = vpack.c.b16 %v114, %v113
    %v130 = vpack.c.b16 %v116, %v115
    %v131 = vpack.c.b16 %v118, %v117
    %v132 = vpack.c.b16 %v120, %v119
    %v133 = vpack.c.b16 %v122, %v121
    %v134 = vpack.c.b16 %v124, %v123
    %v135 = vpack.c.b16 %v126, %v125
    %v136 = vpack.c.b16 %v128, %v127
    %145 = vmatpush.bf16.msra.mxu0 %v136
    %146 = vmatpush.bf16.msra.mxu0 %v135
    %147 = vmatpush.bf16.msra.mxu0 %v134
    %148 = vmatpush.bf16.msra.mxu0 %v133
    %149 = vmatpush.bf16.msra.mxu0 %v132
    %150 = vmatpush.bf16.msra.mxu0 %v131
    %151 = vmatpush.bf16.msra.mxu0 %v130
    %152 = vmatpush.bf16.msra.mxu0 %v129
    %153 = vmatmul.bf16.gmra.mxu0 %v95
    %v154 = vpop.f32.mrf.mxu0
    %v155 = vadd.f32 0.0, %v154
    %v156 = vpop.f32.mrf.mxu0
    %v157 = vadd.f32 0.0, %v156
    %158 = vdwg.mxu0
    %v159 = vadd.f32 %v155, %v157
    %v160 = vrot.slane %v159, 4
    %v161 = vadd.f32 %v159, %v160
    %v162 = vrot.slane %v161, 2
    %v163 = vadd.f32 %v161, %v162
    %v164 = vrot.slane %v163, 1
    %v165 = vadd.f32 %v163, %v164
    %v166 = vmul.f32 %v155, %v155
    %v167 = vmul.f32 %v157, %v157
    %v168 = vadd.f32 %v166, %v167
    %v169 = vrot.slane %v168, 4
    %v170 = vadd.f32 %v168, %v169
    %v171 = vrot.slane %v170, 2
    %v172 = vadd.f32 %v170, %v171
    %v173 = vrot.slane %v172, 1
    %v174 = vadd.f32 %v172, %v173
    %v175 = vmul.f32 %v165, 0.0625
    %v176 = vmul.f32 %v174, 0.0625
    %v177 = vmul.f32 %v175, %v175
    %v178 = vsub.f32 %v176, %v177
    %v179 = vmax.f32 %v178, 0.0
    %v180 = vadd.f32 %v179, 1e-05
    %v181 = vrsqrt.pop %v180
    %v182 = vmul.f32 %v181, %v180
    %v183 = vmul.f32 %v182, %v181
    %v184 = vmul.f32 0.5, %v183
    %v185 = vsub.f32 1.5, %v184
    %v186 = vmul.f32 %v181, %v185
    %vm187 = vweird.f32 %v180
    %vm188 = vweird.f32 %v181
    %vm189 = vmor %vm187, %vm188
    %v190 = vsel %vm189, %v181, %v186
    %v191 = vmul.f32 %v89, %v190
    %v192 = vmul.f32 %v175, %v191
    %v193 = vsub.f32 %v90, %v192
    %v195 = vperm.slane %v191, 0
    %v197 = vmul.f32 %v155, %v195
    %v198 = vmul.f32 %v157, %v195
    %v200 = vperm.slane %v193, 0
    %v202 = vadd.f32 %v197, %v200
    %v203 = vadd.f32 %v198, %v200
    %v204 = vmax.f32 %v202, 0.0
    %v205 = vmax.f32 %v203, 0.0
    %v206 = vpack.c.bf16 %v205, %v204
    %v207 = vld [vmem:[#allocation7] sm:$0xf]
    %v208 = vld [vmem:[#allocation7 + $0x4] sm:$0xf]
    %v209 = vld [vmem:[#allocation7 + $0x8] sm:$0xf]
    %v210 = vld [vmem:[#allocation7 + $0xc] sm:$0xf]
    %v211 = vld [vmem:[#allocation7 + $0x10] sm:$0xf]
    %v212 = vld [vmem:[#allocation7 + $0x14] sm:$0xf]
    %v213 = vld [vmem:[#allocation7 + $0x18] sm:$0xf]
    %v214 = vld [vmem:[#allocation7 + $0x1c] sm:$0xf]
    %v215 = vld [vmem:[#allocation7 + $0x20] sm:$0xf]
    %v216 = vld [vmem:[#allocation7 + $0x24] sm:$0xf]
    %v217 = vld [vmem:[#allocation7 + $0x28] sm:$0xf]
    %v218 = vld [vmem:[#allocation7 + $0x2c] sm:$0xf]
    %v219 = vld [vmem:[#allocation7 + $0x30] sm:$0xf]
    %v220 = vld [vmem:[#allocation7 + $0x34] sm:$0xf]
    %v221 = vld [vmem:[#allocation7 + $0x38] sm:$0xf]
    %v222 = vld [vmem:[#allocation7 + $0x3c] sm:$0xf]
    %v223 = vld [vmem:[%s5] sm:$0x1]
    %v225 = vperm.slane %v223, 0
    %v243 = vunpack.c.l.b16 %v207
    %v244 = vunpack.c.l.b16 %v208
    %v245 = vunpack.c.l.b16 %v209
    %v246 = vunpack.c.l.b16 %v210
    %v247 = vunpack.c.l.b16 %v211
    %v248 = vunpack.c.l.b16 %v212
    %v249 = vunpack.c.l.b16 %v213
    %v250 = vunpack.c.l.b16 %v214
    %v251 = vunpack.c.l.b16 %v215
    %v252 = vunpack.c.l.b16 %v216
    %v253 = vunpack.c.l.b16 %v217
    %v254 = vunpack.c.l.b16 %v218
    %v255 = vunpack.c.l.b16 %v219
    %v256 = vunpack.c.l.b16 %v220
    %v257 = vunpack.c.l.b16 %v221
    %v258 = vunpack.c.l.b16 %v222
    %v259 = vpack.c.b16 %v244, %v243
    %v260 = vpack.c.b16 %v246, %v245
    %v261 = vpack.c.b16 %v248, %v247
    %v262 = vpack.c.b16 %v250, %v249
    %v263 = vpack.c.b16 %v252, %v251
    %v264 = vpack.c.b16 %v254, %v253
    %v265 = vpack.c.b16 %v256, %v255
    %v266 = vpack.c.b16 %v258, %v257
    %275 = vmatpush.bf16.msra.mxu0 %v266
    %276 = vmatpush.bf16.msra.mxu0 %v265
    %277 = vmatpush.bf16.msra.mxu0 %v264
    %278 = vmatpush.bf16.msra.mxu0 %v263
    %279 = vmatpush.bf16.msra.mxu0 %v262
    %280 = vmatpush.bf16.msra.mxu0 %v261
    %281 = vmatpush.bf16.msra.mxu0 %v260
    %282 = vmatpush.bf16.msra.mxu0 %v259
    %283 = vmatmul.bf16.gmra.mxu0 %v206
    %v284 = vpop.f32.mrf.mxu0
    %v285 = vadd.f32 %v225, %v284
    %v286 = vpop.f32.mrf.mxu0
    %v287 = vadd.f32 %v225, %v286
    %288 = vdwg.mxu0
    %289 = vst [vmem:[#allocation8] sm:$0xff] %v285
    %290 = vst [vmem:[#allocation8 + $0x8] sm:$0xff] %v287
    // Predicated region
    $region38: #{tpu_custom_call.1} parent=1 // pred_check
      _
    $region39: #{tpu_custom_call.1} parent=1 // pred_check_branch
      %292 = sbr.rel (0) target = $region41
    $region40: #{tpu_custom_call.1} parent=1 // pred_region
      %294 = vsyncadd [#allocation4], 0
      %s295 = sshll.u32 [#allocation8], 4
      %s296 = int_to_ptr.vmem [resolvable:$true] %s295
      %s297 = sshll.u32 %s6, 4
      %s298 = int_to_ptr.hbm [resolvable:$true] %s297
      %303 = dma.vmem_to_hbm [thread:$0]  %s296, 256, %s298, [#allocation4], 128, 128, 8
    $region41: #{tpu_custom_call.1} parent=1 // pred_fallthru
      _
    // Predicated region
    $region42: #{tpu_custom_call.1} parent=1 // pred_check
      _
    $region43: #{tpu_custom_call.1} parent=1 // pred_check_branch
      %305 = sbr.rel (0) target = $region45
    $region44: #{tpu_custom_call.1} parent=1 // pred_region
      %307 = dma.done [#allocation4], 256
    $region45: #{tpu_custom_call.1} parent=1 // pred_fallthru
      _
    %308 = vsyncpa [#allocation3], 1
    %309 = vsyncpa [#allocation6], 1
    %310 = vsyncpa [#allocation4], 1

</llo_original>
